<compile_context>
chip_gen: v7x
topology: tpu7x:2x2x1
jax: 0.10.0
libtpu: 0.0.40
codegen_flags: <defaults>
</compile_context>

<pallas_src>
import functools

import jax
import jax.numpy as jnp
from jax import lax
from jax.experimental import pallas as pl
from jax.experimental.pallas import tpu as pltpu

_LANES = 128
_SUBLANES = 8
_FOLD_ROWS = 512          # rows per in-kernel fold chunk (bounds vreg live ranges)


def _device_kind():
    try:
        return jax.devices()[0].device_kind.lower()
    except Exception:
        return ""


def _default_num_splits():
    # Only v7x-class parts have 2 TensorCores per chip; on single-TC parts a
    # split is just extra sequential passes (and can force tail masking).
    kind = _device_kind()
    return 2 if ("v7" in kind or "tpu7" in kind) else 1


def _default_block_rows():
    kind = _device_kind()
    if "v5e" in kind or "v5 lite" in kind or "v5lite" in kind:
        return 4096       # 8 MiB double-buffered: fits v5e's 16 MiB scoped default
    return 8192           # 16 MiB double-buffered: fits v6e/v7x 32 MiB scoped default


def _mse_partial_kernel(x_ref, c_ref, part_ref, *, block_rows, fold_rows,
                        steps, total_rows, last_block, has_ragged, has_overrun):
    """Accumulate this core-split's partial sum of (x - c)^2 into an (8,128) bank."""
    c = pl.program_id(0)            # core split      (parallel)
    i = pl.program_id(1)            # reduction step  (arbitrary)
    step = c * steps + i            # global block index

    @pl.when(i == 0)
    def _init():
        part_ref[...] = jnp.zeros((_SUBLANES, _LANES), jnp.float32)

    n_chunks = block_rows // fold_rows

    def accumulate(masked):
        def chunk_body(j, carry):
            r0 = pl.multiple_of(j * fold_rows, _SUBLANES)
            xs = x_ref[pl.ds(r0, fold_rows), :].astype(jnp.float32)
            cs = c_ref[pl.ds(r0, fold_rows), :].astype(jnp.float32)
            d = xs - cs
            d2 = d * d
            if masked:
                # Only the (single) ragged last block pays iota + compare + select.
                row_ids = (step * block_rows + r0
                           + lax.broadcasted_iota(jnp.int32, (fold_rows, _LANES), 0))
                d2 = jnp.where(row_ids < total_rows, d2, 0.0)
            # Fold (fold_rows, 128) -> (8, 128): pure cross-vreg VALU adds.
            part_ref[...] += jnp.sum(
                d2.reshape(fold_rows // _SUBLANES, _SUBLANES, _LANES), axis=0)
            return carry

        lax.fori_loop(0, n_chunks, chunk_body, 0)

    if has_ragged:
        @pl.when(step < last_block)
        def _fast():
            accumulate(False)

        @pl.when(step == last_block)
        def _tail():
            accumulate(True)
        # step > last_block (overrun): skip compute entirely.
    elif has_overrun:
        @pl.when(step <= last_block)
        def _fast():
            accumulate(False)
    else:
        accumulate(False)


def content_loss(x, content_feature, *, block_rows=None, num_splits=None):
    """Mirrors ContentLoss.forward: returns (input, mse_loss(input, content_feature))."""
    assert x.shape == content_feature.shape, "shapes must match for mse_loss"
    n = x.size

    itemsize = min(jnp.dtype(x.dtype).itemsize,
                   jnp.dtype(content_feature.dtype).itemsize)
    sub = _SUBLANES * max(1, 4 // max(1, itemsize))   # f32: 8, bf16: 16, int8/fp8: 32

    if block_rows is None:
        block_rows = _default_block_rows()
    if num_splits is None:
        num_splits = _default_num_splits()

    xf = x.reshape(-1)
    cf = content_feature.reshape(-1)

    rows = n // _LANES                  # complete 128-lane rows
    lane_tail = n - rows * _LANES       # leftover (< 128) elements

    if rows < sub:
        # Degenerate (< one (sub,128) tile of data): a kernel launch is pure overhead.
        d = xf.astype(jnp.float32) - cf.astype(jnp.float32)
        return x, jnp.sum(d * d) / jnp.float32(n)

    # Sub-row remainder: tiny (<128 elem) jnp reduction, never copies the inputs.
    tail_sum = jnp.zeros((), jnp.float32)
    if lane_tail:
        xt = lax.slice(xf, (rows * _LANES,), (n,)).astype(jnp.float32)
        ct = lax.slice(cf, (rows * _LANES,), (n,)).astype(jnp.float32)
        dtail = xt - ct
        tail_sum = jnp.sum(dtail * dtail)

    if lane_tail == 0:
        x2 = xf.reshape(rows, _LANES)   # free bitcast: no HBM copy
        c2 = cf.reshape(rows, _LANES)
    else:
        # Rare (n % 128 != 0): run the kernel on the 128-aligned prefix.  The
        # prefix slice may materialize a copy; still cheaper than padding both
        # full arrays.  TODO(synk): zero-copy 1-D blocking for this rare case.
        x2 = lax.slice(xf, (0,), (rows * _LANES,)).reshape(rows, _LANES)
        c2 = lax.slice(cf, (0,), (rows * _LANES,)).reshape(rows, _LANES)

    # Block size: multiple of the dtype's sublane granularity, capped by the slab.
    br = min(block_rows, (rows // sub) * sub)
    br = max(br, sub)
    fold_rows = _FOLD_ROWS if (br % _FOLD_ROWS == 0) else br

    total_blocks = pl.cdiv(rows, br)
    num_splits = max(1, min(num_splits, total_blocks))
    steps = pl.cdiv(total_blocks, num_splits)
    last_block = total_blocks - 1
    has_ragged = (rows % br) != 0
    has_overrun = steps * num_splits > total_blocks

    if has_overrun:
        # Clamp so DMAs of overrun steps never target an out-of-range block;
        # their compute is skipped inside the kernel.
        idx_map = lambda c, i: (jnp.minimum(c * steps + i, last_block), 0)
    else:
        idx_map = lambda c, i: (c * steps + i, 0)

    kernel = functools.partial(
        _mse_partial_kernel,
        block_rows=br, fold_rows=fold_rows, steps=steps, total_rows=rows,
        last_block=last_block, has_ragged=has_ragged, has_overrun=has_overrun)

    cost = pl.CostEstimate(
        flops=3 * rows * _LANES,
        transcendentals=0,
        bytes_accessed=(rows * _LANES
                        * (jnp.dtype(x.dtype).itemsize
                           + jnp.dtype(content_feature.dtype).itemsize)
                        + num_splits * _SUBLANES * _LANES * 4))

    partials = pl.pallas_call(
        kernel,
        out_shape=jax.ShapeDtypeStruct((num_splits, _SUBLANES, _LANES), jnp.float32),
        grid_spec=pltpu.PrefetchScalarGridSpec(
            num_scalar_prefetch=0,
            grid=(num_splits, steps),
            in_specs=[
                pl.BlockSpec((br, _LANES), idx_map),
                pl.BlockSpec((br, _LANES), idx_map),
            ],
            out_specs=pl.BlockSpec((None, _SUBLANES, _LANES),
                                   lambda c, i: (c, 0, 0)),
        ),
        compiler_params=pltpu.CompilerParams(
            # TODO(synk): on v7x confirm in xprof that the leading axis lands on
            # both TensorCores; if not, switch to pltpu.CORE_PARALLEL.
            dimension_semantics=("parallel", "arbitrary"),
        ),
        cost_estimate=cost,
    )(x2, c2)

    # Tiny final combine (num_splits * 1024 floats) + mean divisor.
    loss = (jnp.sum(partials) + tail_sum) / jnp.float32(n)
    # Module returns the input unchanged; loss is the stored side value.
    return x, loss


if __name__ == "__main__":
    key = jax.random.PRNGKey(0)
    k1, k2, k3, k4 = jax.random.split(key, 4)

    def ref_mse(a, b):
        return jnp.mean((a.astype(jnp.float32) - b.astype(jnp.float32)) ** 2)

    # 1) Small NCHW feature maps (batch=2, channels=4, 16x16): lane-aligned,
    #    single block, pure fast path.
    x = jax.random.normal(k1, (2, 4, 16, 16), dtype=jnp.float32)
    cfeat = jax.random.normal(k2, (2, 4, 16, 16), dtype=jnp.float32)
    out, loss = content_loss(x, cfeat)
    out = jax.block_until_ready(out)
    loss = jax.block_until_ready(loss)
    assert jnp.allclose(out, x), "forward must return input unchanged"
    assert jnp.allclose(loss, ref_mse(x, cfeat), rtol=1e-5, atol=1e-6), (loss, ref_mse(x, cfeat))

    # 2) rows (n/128 = 27) not a multiple of the block: exercises the
    #    last-block-only row-mask path with no padding / extra copies.
    xr = jax.random.normal(k3, (2, 3, 24, 24), dtype=jnp.float32)
    cr = jax.random.normal(k4, (2, 3, 24, 24), dtype=jnp.float32)
    _, loss_r = content_loss(xr, cr)
    loss_r = jax.block_until_ready(loss_r)
    assert jnp.allclose(loss_r, ref_mse(xr, cr), rtol=1e-5, atol=1e-6), (loss_r, ref_mse(xr, cr))

    # 3) n not a multiple of 128: kernel on the aligned prefix + tiny jnp tail.
    k5, k6 = jax.random.split(k3)
    xo = jax.random.normal(k5, (1, 5, 13, 21), dtype=jnp.float32)
    co = jax.random.normal(k6, (1, 5, 13, 21), dtype=jnp.float32)
    _, loss_o = content_loss(xo, co)
    loss_o = jax.block_until_ready(loss_o)
    assert jnp.allclose(loss_o, ref_mse(xo, co), rtol=1e-5, atol=1e-6), (loss_o, ref_mse(xo, co))

    # 4) bf16 features: streamed in original dtype, f32 accumulation in-kernel.
    xb = jax.random.normal(k1, (2, 4, 16, 16), dtype=jnp.bfloat16)
    cb = jax.random.normal(k2, (2, 4, 16, 16), dtype=jnp.bfloat16)
    _, loss_b = content_loss(xb, cb)
    loss_b = jax.block_until_ready(loss_b)
    assert jnp.allclose(loss_b, ref_mse(xb, cb), rtol=1e-4, atol=1e-5), (loss_b, ref_mse(xb, cb))

    print("KERNEL_OK")
</pallas_src>

<mosaic_0001>
module attributes {stable_mosaic.version = 11 : i64} {
  func.func @_mse_partial_kernel(%arg0: i32, %arg1: i32, %arg2: memref<16x128xf32, #tpu.memory_space<vmem>>, %arg3: memref<16x128xf32, #tpu.memory_space<vmem>>, %arg4: memref<1x8x128xf32, #tpu.memory_space<vmem>>) attributes {dimension_semantics = [#tpu.dimension_semantics<parallel>, #tpu.dimension_semantics<arbitrary>], iteration_bounds = array<i64: 1, 1>, scalar_prefetch = 0 : i64, scratch_operands = 0 : i64, tpu.core_type = #tpu.core_type<tc>, window_params = [{transform_indices = @transform_0, window_bounds = array<i64: 16, 128>}, {transform_indices = @transform_1, window_bounds = array<i64: 16, 128>}, {transform_indices = @transform_2, window_bounds = array<i64: 1, 8, 128>}]} {
    %c0_i32 = arith.constant 0 : i32
    %0 = arith.cmpi eq, %arg1, %c0_i32 : i32
    %1 = arith.extui %0 : i1 to i32
    %c0_i32_0 = arith.constant 0 : i32
    %2 = arith.cmpi ne, %1, %c0_i32_0 : i32
    scf.if %2 {
      %cst_9 = arith.constant 0.000000e+00 : f32
      %19 = vector.broadcast %cst_9 : f32 to vector<8x128xf32>
      %c0_10 = arith.constant 0 : index
      %c0_11 = arith.constant 0 : index
      %c0_12 = arith.constant 0 : index
      %20 = vector.load %arg4[%c0_10, %c0_11, %c0_12] : memref<1x8x128xf32, #tpu.memory_space<vmem>>, vector<1x8x128xf32>
      %21 = vector.shape_cast %20 : vector<1x8x128xf32> to vector<8x128xf32>
      %22 = vector.shape_cast %19 : vector<8x128xf32> to vector<1x8x128xf32>
      tpu.vector_store %arg4[%c0_10, %c0_11, %c0_12], %22 {strides = array<i32>} : memref<1x8x128xf32, #tpu.memory_space<vmem>>, vector<1x8x128xf32>,
    } else {
    }
    %c0_i32_1 = arith.constant 0 : i32
    %c16_i32 = arith.constant 16 : i32
    %3 = arith.muli %c0_i32_1, %c16_i32 : i32
    %4 = tpu.assume_multiple %3, 8 : i32
    %5 = arith.index_cast %4 : i32 to index
    %c0 = arith.constant 0 : index
    %6 = vector.load %arg2[%5, %c0] : memref<16x128xf32, #tpu.memory_space<vmem>>, vector<16x128xf32>
    %7 = arith.index_cast %4 : i32 to index
    %c0_2 = arith.constant 0 : index
    %8 = vector.load %arg3[%7, %c0_2] : memref<16x128xf32, #tpu.memory_space<vmem>>, vector<16x128xf32>
    %9 = arith.subf %6, %8 : vector<16x128xf32>
    %10 = arith.mulf %9, %9 : vector<16x128xf32>
    %c0_3 = arith.constant 0 : index
    %c0_4 = arith.constant 0 : index
    %c0_5 = arith.constant 0 : index
    %11 = vector.load %arg4[%c0_3, %c0_4, %c0_5] : memref<1x8x128xf32, #tpu.memory_space<vmem>>, vector<1x8x128xf32>
    %12 = vector.shape_cast %11 : vector<1x8x128xf32> to vector<8x128xf32>
    %13 = vector.shape_cast %10 : vector<16x128xf32> to vector<2x8x128xf32>
    %cst = arith.constant dense<0.000000e+00> : vector<8x128xf32>
    %14 = vector.multi_reduction <add>, %13, %cst [0] : vector<2x8x128xf32> to vector<8x128xf32>
    %15 = arith.addf %12, %14 : vector<8x128xf32>
    %c0_6 = arith.constant 0 : index
    %c0_7 = arith.constant 0 : index
    %c0_8 = arith.constant 0 : index
    %16 = vector.load %arg4[%c0_6, %c0_7, %c0_8] : memref<1x8x128xf32, #tpu.memory_space<vmem>>, vector<1x8x128xf32>
    %17 = vector.shape_cast %16 : vector<1x8x128xf32> to vector<8x128xf32>
    %18 = vector.shape_cast %15 : vector<8x128xf32> to vector<1x8x128xf32>
    tpu.vector_store %arg4[%c0_6, %c0_7, %c0_8], %18 {strides = array<i32>} : memref<1x8x128xf32, #tpu.memory_space<vmem>>, vector<1x8x128xf32>,
    %c1_i32 = arith.constant 1 : i32
    return
  }
  func.func @transform_0(%arg0: i32, %arg1: i32) -> (i32, i32) {
    %c1_i32 = arith.constant 1 : i32
    %0 = arith.muli %arg0, %c1_i32 : i32
    %1 = arith.addi %0, %arg1 : i32
    %c0_i32 = arith.constant 0 : i32
    %c0_i32_0 = arith.constant 0 : i32
    return %1, %c0_i32 : i32, i32
  }
  func.func @transform_1(%arg0: i32, %arg1: i32) -> (i32, i32) {
    %c1_i32 = arith.constant 1 : i32
    %0 = arith.muli %arg0, %c1_i32 : i32
    %1 = arith.addi %0, %arg1 : i32
    %c0_i32 = arith.constant 0 : i32
    %c0_i32_0 = arith.constant 0 : i32
    return %1, %c0_i32 : i32, i32
  }
  func.func @transform_2(%arg0: i32, %arg1: i32) -> (i32, i32, i32) {
    %c0_i32 = arith.constant 0 : i32
    %c0_i32_0 = arith.constant 0 : i32
    %c0_i32_1 = arith.constant 0 : i32
    return %arg0, %c0_i32, %c0_i32_0 : i32, i32, i32
  }
}

</mosaic_0001>

<llo_original>
// kernel: tpu_custom_call.1
$region0: #{tpu_custom_call.1}
  #allocation0 [shape = 'u32[]', space=smem, size = 0x4, offset = 0x4, fixed_abs, tag = 'smem constant byte address 0x4 - core index']
  #allocation1 [shape = 'u32[144,128]{1,0:T(1,128)}', space=vmem, size = 0x12000, scoped, tag = 'internal scratch']
  %s0 = inlined_call_operand.hbm [shape: f32[16,128], index: 0, kind: input, shape index: {}]
  %s1 = inlined_call_operand.hbm [shape: f32[16,128], index: 1, kind: input, shape index: {}]
  %s2 = inlined_call_operand.hbm [shape: f32[1,8,128], index: 2, kind: output, shape index: {}]
  %s3 = sld [smem:[#allocation0]]
  $region30: #{tpu_custom_call.1} parent=0
    _
  %s5 = ssub.s32 1, %s3
  %s6 = scalar_select 0, %s5, %s3
  $region1: #{tpu_custom_call.1} parent=0
    #allocation2 [shape = 'u8[8192]{0}', space=vmem, size = 0x2000, scoped, tag = 'input window, operand 0, single buffered']
    #allocation3 [shape = 's32[1]{0}', space=sflag, size = 0x4, scoped, tag = 'scoped memory for tpu_custom_call.1']
    #allocation4 [shape = 's32[1]{0}', space=sflag, size = 0x4, scoped, tag = 'scoped memory for tpu_custom_call.1']
    #allocation5 [shape = 'u8[8192]{0}', space=vmem, size = 0x2000, scoped, tag = 'input window, operand 1, single buffered']
    #allocation6 [shape = 's32[1]{0}', space=sflag, size = 0x4, scoped, tag = 'scoped memory for tpu_custom_call.1']
    #allocation7 [shape = 'u8[4096]{0}', space=vmem, size = 0x1000, scoped, tag = 'output window, operand 0, single buffered']
    %7 = vsyncpa [#allocation3], 0
    %8 = vsyncpa [#allocation6], 0
    %9 = vsyncpa [#allocation4], 0
    // Predicated region
    $region2: #{tpu_custom_call.1} parent=1 // pred_check
      _
    $region3: #{tpu_custom_call.1} parent=1 // pred_check_branch
      %11 = sbr.rel (0) target = $region5
    $region4: #{tpu_custom_call.1} parent=1 // pred_region
      %s12 = sadd.s32 0, 0
      %s13 = smul.u32 2, %s12
      %s15 = ssub.s32 256, 256
      %16 = vsyncadd [#allocation3], %s15
      %s17 = smul.addr %s13, 128
      %s18 = scalar_lea.hbm %s0, %s17
      %s19 = sshll.u32 [#allocation2], 4
      %s20 = int_to_ptr.vmem [resolvable:$true] %s19
      %25 = dma.hbm_to_vmem [thread:$0]  %s18, 256, %s20, [#allocation3], 128, 128, 8
    $region5: #{tpu_custom_call.1} parent=1 // pred_fallthru
      _
    // Predicated region
    $region6: #{tpu_custom_call.1} parent=1 // pred_check
      _
    $region7: #{tpu_custom_call.1} parent=1 // pred_check_branch
      %27 = sbr.rel (0) target = $region9
    $region8: #{tpu_custom_call.1} parent=1 // pred_region
      %s28 = sadd.s32 0, 0
      %s29 = smul.u32 2, %s28
      %s31 = ssub.s32 256, 256
      %32 = vsyncadd [#allocation6], %s31
      %s33 = smul.addr %s29, 128
      %s34 = scalar_lea.hbm %s1, %s33
      %s35 = sshll.u32 [#allocation5], 4
      %s36 = int_to_ptr.vmem [resolvable:$true] %s35
      %41 = dma.hbm_to_vmem [thread:$0]  %s34, 256, %s36, [#allocation6], 128, 128, 8
    $region9: #{tpu_custom_call.1} parent=1 // pred_fallthru
      _
    // Predicated region
    $region10: #{tpu_custom_call.1} parent=1 // pred_check
      _
    $region11: #{tpu_custom_call.1} parent=1 // pred_check_branch
      %43 = sbr.rel (0) target = $region13
    $region12: #{tpu_custom_call.1} parent=1 // pred_region
      %44 = dma.done [#allocation3], 256
    $region13: #{tpu_custom_call.1} parent=1 // pred_fallthru
      _
    // Predicated region
    $region14: #{tpu_custom_call.1} parent=1 // pred_check
      _
    $region15: #{tpu_custom_call.1} parent=1 // pred_check_branch
      %46 = sbr.rel (0) target = $region17
    $region16: #{tpu_custom_call.1} parent=1 // pred_region
      %47 = dma.done [#allocation6], 256
    $region17: #{tpu_custom_call.1} parent=1 // pred_fallthru
      _
    %s48 = sadd.s32 0, 0
    %s49 = smul.u32 2, %s48
    %s50 = sadd.s32 0, 0
    %s51 = smul.u32 2, %s50
    %p52 = scmp.eq.s32.totalorder 0, 0
    // Predicated region
    $region18: #{tpu_custom_call.1} parent=1 // pred_check
      %p53 = pneg %p52
    $region19: #{tpu_custom_call.1} parent=1 // pred_check_branch
      %55 = sbr.rel (%p53) target = $region21
    $region20: #{tpu_custom_call.1} parent=1 // pred_region
      %56 = vst [vmem:[#allocation7] sm:$0xff] 0.0
    $region21: #{tpu_custom_call.1} parent=1 // pred_fallthru
      _
    %v57 = vld [vmem:[#allocation2] sm:$0xff]
    %v58 = vld [vmem:[#allocation2 + $0x8] sm:$0xff]
    %v59 = vld [vmem:[#allocation5] sm:$0xff]
    %v60 = vld [vmem:[#allocation5 + $0x8] sm:$0xff]
    %v61 = vsub.f32 %v57, %v59
    %v62 = vsub.f32 %v58, %v60
    %v63 = vmul.f32 %v61, %v61
    %v64 = vmul.f32 %v62, %v62
    %v65 = vld [vmem:[#allocation7] sm:$0xff]
    %v66 = vadd.f32 %v63, %v64
    %v67 = vadd.f32 %v65, %v66
    %68 = vst [vmem:[#allocation7] sm:$0xff] %v67
    // Predicated region
    $region22: #{tpu_custom_call.1} parent=1 // pred_check
      _
    $region23: #{tpu_custom_call.1} parent=1 // pred_check_branch
      %70 = sbr.rel (0) target = $region25
    $region24: #{tpu_custom_call.1} parent=1 // pred_region
      %s72 = ssub.s32 128, 128
      %73 = vsyncadd [#allocation4], %s72
      %s75 = sshll.u32 [#allocation7], 4
      %s76 = int_to_ptr.vmem [resolvable:$true] %s75
      %78 = dma.vmem_to_hbm [thread:$0]  %s76, 128, %s2, [#allocation4]
    $region25: #{tpu_custom_call.1} parent=1 // pred_fallthru
      _
    // Predicated region
    $region26: #{tpu_custom_call.1} parent=1 // pred_check
      _
    $region27: #{tpu_custom_call.1} parent=1 // pred_check_branch
      %80 = sbr.rel (0) target = $region29
    $region28: #{tpu_custom_call.1} parent=1 // pred_region
      %81 = dma.done [#allocation4], 128
    $region29: #{tpu_custom_call.1} parent=1 // pred_fallthru
      _
    %82 = vsyncpa [#allocation3], 1
    %83 = vsyncpa [#allocation6], 1
    %84 = vsyncpa [#allocation4], 1

</llo_original>
